<compile_context>
chip_gen: v6e
topology: v6e:2x2x1
jax: 0.10.0
libtpu: 0.0.40
codegen_flags: <defaults>
</compile_context>

<pallas_src>
import math

import jax
import jax.numpy as jnp
from jax.experimental import pallas as pl
from jax.experimental.pallas import tpu as pltpu


def _round_up(x, m):
    return ((x + m - 1) // m) * m


def _sublane_mult(dtype):
    """Sublane-packing multiple for a dtype: f32->8, bf16->16, int8->32."""
    itemsize = jnp.dtype(dtype).itemsize
    return 8 * max(1, 4 // itemsize)


def _int_pow(base, e):
    """base**e for a static non-negative integer e via repeated squaring (VPU only)."""
    if e == 0:
        return jnp.ones_like(base)
    result = None
    cur = base
    while e > 0:
        if e & 1:
            result = cur if result is None else result * cur
        e >>= 1
        if e:
            cur = cur * cur
    return result


def _make_asl_kernel(gamma_neg, gamma_pos, clip, eps, row_tile, C, B_true,
                     needs_mask, use_int_gamma, fold_lanes):
    """Pallas kernel body closed over the static ASL hyper-parameters."""
    log_eps = math.log(eps)
    log_1m_eps = math.log1p(-eps)

    def fold_and_store(loss, out_ref):
        # VPU-only fold (row_tile, C) -> (8, C); negate folds the final `loss = -loss`.
        partial = -loss.reshape(row_tile // 8, 8, C).sum(axis=0)
        if fold_lanes:
            # Fold the lane axis with static, 128-aligned slices (vreg-to-vreg adds).
            acc = partial[:, 0:128]
            for j in range(1, C // 128):
                acc = acc + partial[:, j * 128:(j + 1) * 128]
            partial = acc
        out_ref[...] = partial[None, :, :]

    def kernel(logits_ref, targets_ref, out_ref):
        i = pl.program_id(0)

        x = logits_ref[...].astype(jnp.float32)
        t = targets_ref[...].astype(jnp.float32)

        # ---- stable log-sigmoid: 1 exp + 1 log + 1 divide per element ----
        a = jnp.abs(x)
        e = jnp.exp(-a)                      # exp(-|x|) in (0, 1]
        sp = jnp.log(1.0 + e)                # softplus(-|x|)
        log_p = jnp.minimum(x, 0.0) - sp     # log(sigmoid(x))
        log_q = jnp.minimum(-x, 0.0) - sp    # log(1 - sigmoid(x))
        # clamp probabilities to [eps, 1-eps] == clamp in log space (monotone)
        log_p = jnp.clip(log_p, log_eps, log_1m_eps)
        log_q = jnp.clip(log_q, log_eps, log_1m_eps)

        loss_pos = t * log_p
        loss_neg = (1.0 - t) * log_q
        if clip is not None and clip > 0:
            # NB: this module clamps the negative *log term* (torch.clamp(min=-clip)),
            # not the canonical ASL probability shift -- kept faithful to the spec.
            loss_neg = jnp.maximum(loss_neg, -clip)
        loss = loss_pos + loss_neg

        # ---- probabilities for the asymmetric focusing term ----
        r = 1.0 / (1.0 + e)                        # sigmoid(|x|)
        sigma = jnp.where(x >= 0.0, r, 1.0 - r)    # sigmoid(x)
        xs_pos = jnp.clip(sigma, eps, 1.0 - eps)
        xs_neg = 1.0 - xs_pos                      # == clip(1 - sigma, eps, 1 - eps)

        if use_int_gamma:
            # Binary-target fast path: 1-pt selected directly, powers via VPU muls.
            t_pos = t > 0.5
            base = jnp.where(t_pos, xs_neg, xs_pos)          # == 1 - pt
            focus = jnp.where(t_pos,
                              _int_pow(base, int(gamma_pos)),
                              _int_pow(base, int(gamma_neg)))
        else:
            pt = xs_pos * t + xs_neg * (1.0 - t)
            one_minus_pt = 1.0 - pt
            gamma = gamma_pos * t + gamma_neg * (1.0 - t)
            # (1-pt)**gamma via exp/log; base<=0 -> 0 (matches pow for gamma>0).
            focus = jnp.exp(gamma * jnp.log(jnp.maximum(one_minus_pt, 1e-30)))
            focus = jnp.where(one_minus_pt > 0.0, focus, 0.0)
        loss = loss * focus

        if needs_mask:
            is_tail = i == pl.num_programs(0) - 1

            @pl.when(is_tail)
            def _():
                # (row_tile, 1) iota column; broadcast over C in the select.
                row = (jax.lax.broadcasted_iota(jnp.int32, (row_tile, 1), 0)
                       + i * row_tile)
                fold_and_store(jnp.where(row < B_true, loss, 0.0), out_ref)

            @pl.when(jnp.logical_not(is_tail))
            def _():
                fold_and_store(loss, out_ref)
        else:
            fold_and_store(loss, out_ref)

    return kernel


def asymmetric_loss(logits, targets, *, gamma_neg=4, gamma_pos=1, clip=0.05,
                    eps=1e-8, reduction="mean", row_tile=None,
                    assume_binary_targets=False,
                    target_block_bytes=3 << 20):
    """Pallas TPU forward of AsymmetricLoss.  Returns a float32 scalar."""
    assert logits.shape == targets.shape and logits.ndim == 2
    B, C = logits.shape

    # ---- tile choice: ~target_block_bytes (f32-equivalent) per input block ----
    mult = max(_sublane_mult(logits.dtype), _sublane_mult(targets.dtype))
    if row_tile is None:
        rows = max(mult, (target_block_bytes // (C * 4)) // mult * mult)
        row_tile = min(rows, _round_up(B, mult))
    row_tile = max(mult, (row_tile // mult) * mult)

    num_tiles = pl.cdiv(B, row_tile)       # no jnp.pad: tail handled in-kernel
    needs_mask = (B % row_tile) != 0

    use_int_gamma = (assume_binary_targets
                     and float(gamma_neg).is_integer()
                     and float(gamma_pos).is_integer()
                     and gamma_neg >= 0 and gamma_pos >= 0)

    fold_lanes = (C % 128 == 0) and (C > 128)
    C_out = 128 if fold_lanes else C

    kernel = _make_asl_kernel(gamma_neg, gamma_pos, clip, eps, row_tile, C,
                              B, needs_mask, use_int_gamma, fold_lanes)

    partials = pl.pallas_call(
        kernel,
        out_shape=jax.ShapeDtypeStruct((num_tiles, 8, C_out), jnp.float32),
        grid_spec=pltpu.PrefetchScalarGridSpec(
            num_scalar_prefetch=0,
            grid=(num_tiles,),
            in_specs=[
                pl.BlockSpec((row_tile, C), lambda i: (i, 0)),
                pl.BlockSpec((row_tile, C), lambda i: (i, 0)),
            ],
            # each grid step owns its own lane-dense output block -> parallel grid
            out_specs=pl.BlockSpec((1, 8, C_out), lambda i: (i, 0, 0)),
        ),
        compiler_params=pltpu.CompilerParams(
            dimension_semantics=("parallel",),
            # 48 MiB: above v5e's 16 MiB scoped default, within v7x's 64 MiB VMEM.
            vmem_limit_bytes=48 << 20),
    )(logits, targets)

    total = jnp.sum(partials)   # tiny array; final cross-lane reduce done by XLA
    if reduction == "mean":
        return total / jnp.float32(B * C)
    return total


def asymmetric_loss_ref(logits, targets, *, gamma_neg=4, gamma_pos=1,
                        clip=0.05, eps=1e-8, reduction="mean"):
    """Pure-JAX reference mirroring the PyTorch forward exactly."""
    x = logits.astype(jnp.float32)
    t = targets.astype(jnp.float32)
    xsig = jax.nn.sigmoid(x)
    xs_pos = jnp.clip(xsig, eps, 1.0 - eps)
    xs_neg = jnp.clip(1.0 - xsig, eps, 1.0 - eps)
    loss_pos = t * jnp.log(xs_pos)
    loss_neg = (1.0 - t) * jnp.log(xs_neg)
    if clip is not None and clip > 0:
        loss_neg = jnp.maximum(loss_neg, -clip)
    loss = loss_pos + loss_neg
    pt = xs_pos * t + xs_neg * (1.0 - t)
    gamma = gamma_pos * t + gamma_neg * (1.0 - t)
    loss = -(loss * jnp.power(1.0 - pt, gamma))
    return loss.mean() if reduction == "mean" else loss.sum()


if __name__ == "__main__":
    key = jax.random.PRNGKey(0)
    k1, k2, k3, k4 = jax.random.split(key, 4)

    # Case 1: small aligned problem, f32, binary-target fast path, mean reduction.
    B, C = 16, 128
    logits = jax.random.normal(k1, (B, C), dtype=jnp.float32) * 2.0
    targets = (jax.random.uniform(k2, (B, C)) > 0.7).astype(jnp.float32)
    out = jax.block_until_ready(
        asymmetric_loss(logits, targets, assume_binary_targets=True))
    ref = asymmetric_loss_ref(logits, targets)
    assert jnp.allclose(out, ref, rtol=2e-5, atol=1e-5), (out, ref)

    # Case 2: unaligned batch (tail-mask path, no padding), bf16 inputs,
    #         lane-folded partials (C=256), general gamma path, sum reduction.
    B2, C2 = 13, 256
    logits2 = (jax.random.normal(k3, (B2, C2), dtype=jnp.float32) * 2.0
               ).astype(jnp.bfloat16)
    targets2 = (jax.random.uniform(k4, (B2, C2)) > 0.6).astype(jnp.bfloat16)
    out2 = jax.block_until_ready(
        asymmetric_loss(logits2, targets2, reduction="sum"))
    ref2 = asymmetric_loss_ref(logits2, targets2, reduction="sum")
    assert jnp.allclose(out2, ref2, rtol=1e-4, atol=1e-3), (out2, ref2)

    print("KERNEL_OK")
</pallas_src>

<mosaic_0001>
module attributes {stable_mosaic.version = 11 : i64} {
  func.func @kernel(%arg0: i32, %arg1: memref<16x128xf32, #tpu.memory_space<vmem>>, %arg2: memref<16x128xf32, #tpu.memory_space<vmem>>, %arg3: memref<1x8x128xf32, #tpu.memory_space<vmem>>) attributes {dimension_semantics = [#tpu.dimension_semantics<parallel>], iteration_bounds = array<i64: 1>, scalar_prefetch = 0 : i64, scratch_operands = 0 : i64, tpu.core_type = #tpu.core_type<tc>, window_params = [{transform_indices = @transform_0, window_bounds = array<i64: 16, 128>}, {transform_indices = @transform_1, window_bounds = array<i64: 16, 128>}, {transform_indices = @transform_2, window_bounds = array<i64: 1, 8, 128>}]} {
    %c0 = arith.constant 0 : index
    %c0_0 = arith.constant 0 : index
    %0 = vector.load %arg1[%c0, %c0_0] : memref<16x128xf32, #tpu.memory_space<vmem>>, vector<16x128xf32>
    %c0_1 = arith.constant 0 : index
    %c0_2 = arith.constant 0 : index
    %1 = vector.load %arg2[%c0_1, %c0_2] : memref<16x128xf32, #tpu.memory_space<vmem>>, vector<16x128xf32>
    %2 = math.absf %0 : vector<16x128xf32>
    %cst = arith.constant 0.000000e+00 : f32
    %3 = vector.broadcast %cst : f32 to vector<16x128xf32>
    %4 = arith.subf %3, %2 : vector<16x128xf32>
    %5 = math.exp %4 : vector<16x128xf32>
    %cst_3 = arith.constant 1.000000e+00 : f32
    %6 = vector.broadcast %cst_3 : f32 to vector<16x128xf32>
    %7 = arith.addf %6, %5 : vector<16x128xf32>
    %8 = math.log %7 : vector<16x128xf32>
    %cst_4 = arith.constant 0.000000e+00 : f32
    %9 = vector.broadcast %cst_4 : f32 to vector<16x128xf32>
    %10 = arith.minimumf %0, %9 : vector<16x128xf32>
    %11 = arith.subf %10, %8 : vector<16x128xf32>
    %cst_5 = arith.constant 0.000000e+00 : f32
    %12 = vector.broadcast %cst_5 : f32 to vector<16x128xf32>
    %13 = arith.subf %12, %0 : vector<16x128xf32>
    %cst_6 = arith.constant 0.000000e+00 : f32
    %14 = vector.broadcast %cst_6 : f32 to vector<16x128xf32>
    %15 = arith.minimumf %13, %14 : vector<16x128xf32>
    %16 = arith.subf %15, %8 : vector<16x128xf32>
    %cst_7 = arith.constant -18.420681 : f32
    %cst_8 = arith.constant -9.99999993E-9 : f32
    %17 = vector.broadcast %cst_7 : f32 to vector<16x128xf32>
    %18 = arith.maximumf %17, %11 : vector<16x128xf32>
    %19 = vector.broadcast %cst_8 : f32 to vector<16x128xf32>
    %20 = arith.minimumf %19, %18 : vector<16x128xf32>
    %cst_9 = arith.constant -18.420681 : f32
    %cst_10 = arith.constant -9.99999993E-9 : f32
    %21 = vector.broadcast %cst_9 : f32 to vector<16x128xf32>
    %22 = arith.maximumf %21, %16 : vector<16x128xf32>
    %23 = vector.broadcast %cst_10 : f32 to vector<16x128xf32>
    %24 = arith.minimumf %23, %22 : vector<16x128xf32>
    %25 = arith.mulf %1, %20 : vector<16x128xf32>
    %cst_11 = arith.constant 1.000000e+00 : f32
    %26 = vector.broadcast %cst_11 : f32 to vector<16x128xf32>
    %27 = arith.subf %26, %1 : vector<16x128xf32>
    %28 = arith.mulf %27, %24 : vector<16x128xf32>
    %cst_12 = arith.constant -5.000000e-02 : f32
    %29 = vector.broadcast %cst_12 : f32 to vector<16x128xf32>
    %30 = arith.maximumf %28, %29 : vector<16x128xf32>
    %31 = arith.addf %25, %30 : vector<16x128xf32>
    %cst_13 = arith.constant 1.000000e+00 : f32
    %32 = vector.broadcast %cst_13 : f32 to vector<16x128xf32>
    %33 = arith.addf %32, %5 : vector<16x128xf32>
    %cst_14 = arith.constant 1.000000e+00 : f32
    %34 = vector.broadcast %cst_14 : f32 to vector<16x128xf32>
    %35 = arith.divf %34, %33 : vector<16x128xf32>
    %cst_15 = arith.constant 0.000000e+00 : f32
    %36 = vector.broadcast %cst_15 : f32 to vector<16x128xf32>
    %37 = arith.cmpf oge, %0, %36 : vector<16x128xf32>
    %cst_16 = arith.constant 1.000000e+00 : f32
    %38 = vector.broadcast %cst_16 : f32 to vector<16x128xf32>
    %39 = arith.subf %38, %35 : vector<16x128xf32>
    %40 = arith.select %37, %35, %39 : vector<16x128xi1>, vector<16x128xf32>
    %cst_17 = arith.constant 9.99999993E-9 : f32
    %cst_18 = arith.constant 1.000000e+00 : f32
    %41 = vector.broadcast %cst_17 : f32 to vector<16x128xf32>
    %42 = arith.maximumf %41, %40 : vector<16x128xf32>
    %43 = vector.broadcast %cst_18 : f32 to vector<16x128xf32>
    %44 = arith.minimumf %43, %42 : vector<16x128xf32>
    %cst_19 = arith.constant 1.000000e+00 : f32
    %45 = vector.broadcast %cst_19 : f32 to vector<16x128xf32>
    %46 = arith.subf %45, %44 : vector<16x128xf32>
    %cst_20 = arith.constant 5.000000e-01 : f32
    %47 = vector.broadcast %cst_20 : f32 to vector<16x128xf32>
    %48 = arith.cmpf ogt, %1, %47 : vector<16x128xf32>
    %49 = arith.select %48, %46, %44 : vector<16x128xi1>, vector<16x128xf32>
    %50 = arith.mulf %49, %49 : vector<16x128xf32>
    %51 = arith.mulf %50, %50 : vector<16x128xf32>
    %52 = arith.select %48, %49, %51 : vector<16x128xi1>, vector<16x128xf32>
    %53 = arith.mulf %31, %52 : vector<16x128xf32>
    %54 = vector.shape_cast %53 : vector<16x128xf32> to vector<2x8x128xf32>
    %cst_21 = arith.constant dense<0.000000e+00> : vector<8x128xf32>
    %55 = vector.multi_reduction <add>, %54, %cst_21 [0] : vector<2x8x128xf32> to vector<8x128xf32>
    %cst_22 = arith.constant 0.000000e+00 : f32
    %56 = vector.broadcast %cst_22 : f32 to vector<8x128xf32>
    %57 = arith.subf %56, %55 : vector<8x128xf32>
    %58 = vector.shape_cast %57 : vector<8x128xf32> to vector<1x8x128xf32>
    %c0_23 = arith.constant 0 : index
    %c0_24 = arith.constant 0 : index
    %c0_25 = arith.constant 0 : index
    %59 = vector.load %arg3[%c0_23, %c0_24, %c0_25] : memref<1x8x128xf32, #tpu.memory_space<vmem>>, vector<1x8x128xf32>
    tpu.vector_store %arg3[%c0_23, %c0_24, %c0_25], %58 {strides = array<i32>} : memref<1x8x128xf32, #tpu.memory_space<vmem>>, vector<1x8x128xf32>,
    return
  }
  func.func @transform_0(%arg0: i32) -> (i32, i32) {
    %c0_i32 = arith.constant 0 : i32
    %c0_i32_0 = arith.constant 0 : i32
    return %arg0, %c0_i32 : i32, i32
  }
  func.func @transform_1(%arg0: i32) -> (i32, i32) {
    %c0_i32 = arith.constant 0 : i32
    %c0_i32_0 = arith.constant 0 : i32
    return %arg0, %c0_i32 : i32, i32
  }
  func.func @transform_2(%arg0: i32) -> (i32, i32, i32) {
    %c0_i32 = arith.constant 0 : i32
    %c0_i32_0 = arith.constant 0 : i32
    %c0_i32_1 = arith.constant 0 : i32
    return %arg0, %c0_i32, %c0_i32_0 : i32, i32, i32
  }
}

</mosaic_0001>

<llo_original>
// kernel: tpu_custom_call.1
$region0: #{tpu_custom_call.1}
  #allocation0 [shape = 'u32[]', space=smem, size = 0x4, offset = 0x4, fixed_abs, tag = 'smem constant byte address 0x4 - core index']
  #allocation1 [shape = 'u32[144,128]{1,0:T(1,128)}', space=vmem, size = 0x12000, scoped, tag = 'internal scratch']
  %s0 = inlined_call_operand.hbm [shape: f32[16,128], index: 0, kind: input, shape index: {}]
  %s1 = inlined_call_operand.hbm [shape: f32[16,128], index: 1, kind: input, shape index: {}]
  %s2 = inlined_call_operand.hbm [shape: f32[1,8,128], index: 2, kind: output, shape index: {}]
  %s3 = sld [smem:[#allocation0]]
  $region26: #{tpu_custom_call.1} parent=0
    _
  %s5 = ssub.s32 1, %s3
  %s6 = scalar_select 0, %s5, %s3
  $region1: #{tpu_custom_call.1} parent=0
    #allocation2 [shape = 'u8[8192]{0}', space=vmem, size = 0x2000, scoped, tag = 'input window, operand 0, single buffered']
    #allocation3 [shape = 's32[1]{0}', space=sflag, size = 0x4, scoped, tag = 'scoped memory for tpu_custom_call.1']
    #allocation4 [shape = 's32[1]{0}', space=sflag, size = 0x4, scoped, tag = 'scoped memory for tpu_custom_call.1']
    #allocation5 [shape = 'u8[8192]{0}', space=vmem, size = 0x2000, scoped, tag = 'input window, operand 1, single buffered']
    #allocation6 [shape = 's32[1]{0}', space=sflag, size = 0x4, scoped, tag = 'scoped memory for tpu_custom_call.1']
    #allocation7 [shape = 'u8[4096]{0}', space=vmem, size = 0x1000, scoped, tag = 'output window, operand 0, single buffered']
    %7 = vsyncpa [#allocation3], 0
    %8 = vsyncpa [#allocation6], 0
    %9 = vsyncpa [#allocation4], 0
    // Predicated region
    $region2: #{tpu_custom_call.1} parent=1 // pred_check
      _
    $region3: #{tpu_custom_call.1} parent=1 // pred_check_branch
      %11 = sbr.rel (0) target = $region5
    $region4: #{tpu_custom_call.1} parent=1 // pred_region
      %s13 = ssub.s32 256, 256
      %14 = vsyncadd [#allocation3], %s13
      %s15 = sshll.u32 [#allocation2], 4
      %s16 = int_to_ptr.vmem [resolvable:$true] %s15
      %21 = dma.hbm_to_vmem [thread:$0]  %s0, 256, %s16, [#allocation3], 128, 128, 8
    $region5: #{tpu_custom_call.1} parent=1 // pred_fallthru
      _
    // Predicated region
    $region6: #{tpu_custom_call.1} parent=1 // pred_check
      _
    $region7: #{tpu_custom_call.1} parent=1 // pred_check_branch
      %23 = sbr.rel (0) target = $region9
    $region8: #{tpu_custom_call.1} parent=1 // pred_region
      %s25 = ssub.s32 256, 256
      %26 = vsyncadd [#allocation6], %s25
      %s27 = sshll.u32 [#allocation5], 4
      %s28 = int_to_ptr.vmem [resolvable:$true] %s27
      %33 = dma.hbm_to_vmem [thread:$0]  %s1, 256, %s28, [#allocation6], 128, 128, 8
    $region9: #{tpu_custom_call.1} parent=1 // pred_fallthru
      _
    // Predicated region
    $region10: #{tpu_custom_call.1} parent=1 // pred_check
      _
    $region11: #{tpu_custom_call.1} parent=1 // pred_check_branch
      %35 = sbr.rel (0) target = $region13
    $region12: #{tpu_custom_call.1} parent=1 // pred_region
      %36 = dma.done [#allocation3], 256
    $region13: #{tpu_custom_call.1} parent=1 // pred_fallthru
      _
    // Predicated region
    $region14: #{tpu_custom_call.1} parent=1 // pred_check
      _
    $region15: #{tpu_custom_call.1} parent=1 // pred_check_branch
      %38 = sbr.rel (0) target = $region17
    $region16: #{tpu_custom_call.1} parent=1 // pred_region
      %39 = dma.done [#allocation6], 256
    $region17: #{tpu_custom_call.1} parent=1 // pred_fallthru
      _
    %v40 = vld [vmem:[#allocation2] sm:$0xff]
    %v41 = vld [vmem:[#allocation2 + $0x8] sm:$0xff]
    %v42 = vld [vmem:[#allocation5] sm:$0xff]
    %v43 = vld [vmem:[#allocation5 + $0x8] sm:$0xff]
    %v44 = vand.u32 2147483647, %v40
    %v45 = vand.u32 2147483647, %v41
    %v46 = vsub.f32 0.0, %v44
    %v47 = vsub.f32 0.0, %v45
    %v48 = vmul.f32 %v46, 1.442695
    %v49 = vpow.pop %v48
    %v50 = vmul.f32 %v47, 1.442695
    %v51 = vpow.pop %v50
    %v52 = vadd.f32 %v49, 1.0
    %v53 = vadd.f32 %v51, 1.0
    %v54 = vlog2.pop %v52
    %v55 = vmul.f32 %v54, 0.6931472
    %v56 = vlog2.pop %v53
    %v57 = vmul.f32 %v56, 0.6931472
    %v58 = vmin.f32 %v40, 0.0
    %v59 = vmin.f32 %v41, 0.0
    %v60 = vsub.f32 %v58, %v55
    %v61 = vsub.f32 %v59, %v57
    %v62 = vsub.f32 0.0, %v40
    %v63 = vsub.f32 0.0, %v41
    %v64 = vmin.f32 %v62, 0.0
    %v65 = vmin.f32 %v63, 0.0
    %v66 = vsub.f32 %v64, %v55
    %v67 = vsub.f32 %v65, %v57
    %v68 = vmax.f32 %v60, -18.420681
    %v69 = vmax.f32 %v61, -18.420681
    %v70 = vmin.f32 %v68, -1e-08
    %v71 = vmin.f32 %v69, -1e-08
    %v72 = vmax.f32 %v66, -18.420681
    %v73 = vmax.f32 %v67, -18.420681
    %v74 = vmin.f32 %v72, -1e-08
    %v75 = vmin.f32 %v73, -1e-08
    %v76 = vmul.f32 %v42, %v70
    %v77 = vmul.f32 %v43, %v71
    %v78 = vsub.f32 1.0, %v42
    %v79 = vsub.f32 1.0, %v43
    %v80 = vmul.f32 %v78, %v74
    %v81 = vmul.f32 %v79, %v75
    %v82 = vmax.f32 %v80, -0.05
    %v83 = vmax.f32 %v81, -0.05
    %v84 = vadd.f32 %v76, %v82
    %v85 = vadd.f32 %v77, %v83
    %v86 = vrcp.pop %v52
    %v87 = vmul.f32 1.0, %v86
    %v88 = vrcp.pop %v53
    %v89 = vmul.f32 1.0, %v88
    %vm90 = vcmp.ge.f32.partialorder %v40, 0.0
    %vm91 = vcmp.ge.f32.partialorder %v41, 0.0
    %v92 = vsub.f32 1.0, %v87
    %v93 = vsub.f32 1.0, %v89
    %v94 = vsel %vm90, %v87, %v92
    %v95 = vsel %vm91, %v89, %v93
    %v96 = vmax.f32 %v94, 1e-08
    %v97 = vmax.f32 %v95, 1e-08
    %v98 = vmin.f32 %v96, 1.0
    %v99 = vmin.f32 %v97, 1.0
    %v100 = vsub.f32 1.0, %v98
    %v101 = vsub.f32 1.0, %v99
    %vm102 = vcmp.gt.f32.partialorder %v42, 0.5
    %vm103 = vcmp.gt.f32.partialorder %v43, 0.5
    %v104 = vsel %vm102, %v100, %v98
    %v105 = vsel %vm103, %v101, %v99
    %v106 = vmul.f32 %v104, %v104
    %v107 = vmul.f32 %v105, %v105
    %v108 = vmul.f32 %v106, %v106
    %v109 = vmul.f32 %v107, %v107
    %v110 = vsel %vm102, %v100, %v108
    %v111 = vsel %vm103, %v101, %v109
    %v112 = vmul.f32 %v84, %v110
    %v113 = vmul.f32 %v85, %v111
    %v114 = vadd.f32 %v112, %v113
    %v115 = vsub.f32 0.0, %v114
    %116 = vst [vmem:[#allocation7] sm:$0xff] %v115
    // Predicated region
    $region18: #{tpu_custom_call.1} parent=1 // pred_check
      _
    $region19: #{tpu_custom_call.1} parent=1 // pred_check_branch
      %118 = sbr.rel (0) target = $region21
    $region20: #{tpu_custom_call.1} parent=1 // pred_region
      %s120 = ssub.s32 128, 128
      %121 = vsyncadd [#allocation4], %s120
      %s123 = sshll.u32 [#allocation7], 4
      %s124 = int_to_ptr.vmem [resolvable:$true] %s123
      %126 = dma.vmem_to_hbm [thread:$0]  %s124, 128, %s2, [#allocation4]
    $region21: #{tpu_custom_call.1} parent=1 // pred_fallthru
      _
    // Predicated region
    $region22: #{tpu_custom_call.1} parent=1 // pred_check
      _
    $region23: #{tpu_custom_call.1} parent=1 // pred_check_branch
      %128 = sbr.rel (0) target = $region25
    $region24: #{tpu_custom_call.1} parent=1 // pred_region
      %129 = dma.done [#allocation4], 128
    $region25: #{tpu_custom_call.1} parent=1 // pred_fallthru
      _
    %130 = vsyncpa [#allocation3], 1
    %131 = vsyncpa [#allocation6], 1
    %132 = vsyncpa [#allocation4], 1

</llo_original>
